<compile_context>
chip_gen: v5e
topology: v5e:2x2
jax: 0.10.0
libtpu: 0.0.40
codegen_flags: <defaults>
</compile_context>

<pallas_src>
import functools

import numpy as np
import jax
import jax.numpy as jnp
from jax.experimental import pallas as pl
from jax.experimental.pallas import tpu as pltpu

_LANE = 128


def _round_up(x, m):
    return (x + m - 1) // m * m


# ---------------------------------------------------------------------------
# Kernel
# ---------------------------------------------------------------------------
def gottlieb_kan_kernel(alpha_ref, x_ref, c0_ref, ccat_ref, gamma_ref,
                        beta_ref, o_ref, *, degree, i_pad, out_dim,
                        use_layernorm, eps):
    """One batch tile: x (TB, I_pad) -> out (TB, O_pad)."""
    alpha = alpha_ref[0]                                     # scalar (SMEM)
    s = jax.nn.sigmoid(x_ref[...].astype(jnp.float32))       # (TB, I_pad) f32

    # Degree-0 basis is identically 1 -> precomputed column sum c0 (f32).
    # Degrees 1..D: Gottlieb recurrence in f32 (static unroll).  Each G_d is
    # cast to bf16 exactly once and folded into the accumulator via its own
    # MXU matmul against the matching I_pad-row block of ccat; only
    # g_{n-1}/g_{n-2} stay live (no f32 concat slab).
    g_nm2 = jnp.ones_like(s)                                 # G0
    g_nm1 = 2.0 * alpha * s                                  # G1
    acc = c0_ref[...] + jnp.dot(
        g_nm1.astype(jnp.bfloat16), ccat_ref[pl.ds(0, i_pad), :],
        preferred_element_type=jnp.float32)                  # (TB, O_pad) f32
    for n in range(2, degree + 1):
        g_n = (2.0 * (alpha + (n - 1)) * s * g_nm1
               - (alpha + (2 * n - 2)) * g_nm2)
        acc = acc + jnp.dot(
            g_n.astype(jnp.bfloat16),
            ccat_ref[pl.ds((n - 1) * i_pad, i_pad), :],
            preferred_element_type=jnp.float32)
        g_nm2, g_nm1 = g_nm1, g_n

    if use_layernorm:
        # Masked two-pass statistics over the *real* output_dim: robust to
        # whatever lives in padded lanes and avoids E[x^2]-E[x]^2 cancellation.
        inv_o = 1.0 / out_dim
        o_pad = acc.shape[-1]
        if o_pad > out_dim:
            lane = jax.lax.broadcasted_iota(jnp.int32, acc.shape, 1)
            valid = lane < out_dim
            mean = jnp.sum(jnp.where(valid, acc, 0.0), axis=-1,
                           keepdims=True) * inv_o
            centered = jnp.where(valid, acc - mean, 0.0)
        else:
            mean = jnp.sum(acc, axis=-1, keepdims=True) * inv_o
            centered = acc - mean
        var = jnp.sum(centered * centered, axis=-1, keepdims=True) * inv_o
        acc = centered * jax.lax.rsqrt(var + eps)
        acc = acc * gamma_ref[...] + beta_ref[...]

    o_ref[...] = acc.astype(o_ref.dtype)


# ---------------------------------------------------------------------------
# One-time parameter re-layout (keep OUT of the per-call path)
# ---------------------------------------------------------------------------
def prepare_gottlieb_params(coeffs, gamma, beta, *, degree):
    in_dim, out_dim, d1 = coeffs.shape
    assert d1 == degree + 1
    deg_eff = max(degree, 1)
    i_pad = _round_up(in_dim, _LANE)
    o_pad = _round_up(out_dim, _LANE)

    # Degree-0 basis is all-ones -> its matmul collapses to a column sum.
    c0 = jnp.sum(coeffs[:, :, 0].astype(jnp.float32), axis=0).reshape(1, out_dim)
    c0 = jnp.pad(c0, ((0, 0), (0, o_pad - out_dim)))

    if degree >= 1:
        ccat = jnp.transpose(coeffs[:, :, 1:], (2, 0, 1))    # (deg, I, O)
    else:  # dummy zero weight keeps one kernel code path for degree == 0
        ccat = jnp.zeros((1, in_dim, out_dim), coeffs.dtype)
    # INVARIANT (relied on by the kernel): padded I rows and padded O columns
    # of ccat are exactly zero so padded x columns contribute nothing.
    ccat = jnp.pad(ccat, ((0, 0), (0, i_pad - in_dim), (0, o_pad - out_dim)))
    ccat = ccat.reshape(deg_eff * i_pad, o_pad).astype(jnp.bfloat16)

    gamma_p = jnp.pad(gamma.astype(jnp.float32).reshape(1, out_dim),
                      ((0, 0), (0, o_pad - out_dim)))
    beta_p = jnp.pad(beta.astype(jnp.float32).reshape(1, out_dim),
                     ((0, 0), (0, o_pad - out_dim)))
    return c0, ccat, gamma_p, beta_p


# ---------------------------------------------------------------------------
# VMEM sizing helpers (generation-aware)
# ---------------------------------------------------------------------------
def _vmem_budget_and_limit():
    try:
        cap = int(pltpu.get_tpu_info().vmem_capacity_bytes)
    except Exception:  # conservative fallback: size for v7x (64 MiB per TC)
        cap = 64 * 1024 * 1024
    if cap >= 96 * 1024 * 1024:                    # v5e / v6e: 128 MiB VMEM
        return 96 * 1024 * 1024, 110 * 1024 * 1024
    return 44 * 1024 * 1024, 56 * 1024 * 1024      # v7x: leave ~8 MiB headroom


def _working_set(tb, i_pad, o_pad, coeff_bytes, x_bytes, out_bytes, xo_bufs):
    per_row = (xo_bufs * i_pad * x_bytes           # pipelined x buffers
               + 4 * i_pad * 4                     # s, g_nm1, g_nm2, g_n (f32)
               + i_pad * 2                         # bf16 staging for one G_d
               + o_pad * 4                         # f32 accumulator
               + xo_bufs * o_pad * out_bytes)      # pipelined out buffers
    fixed = coeff_bytes + 8 * o_pad * 4            # single-buffered residents
    return fixed, per_row, fixed + tb * per_row


def _choose_batch_tile(batch, i_pad, o_pad, coeff_bytes, budget, x_bytes,
                       out_bytes, xo_bufs):
    """Batch tile: multiple of 16 (bf16 pack / min MXU tile), inside the VMEM
    budget, and near a divisor of the 16-rounded batch (no b_pad overshoot)."""
    fixed, per_row, _ = _working_set(1, i_pad, o_pad, coeff_bytes, x_bytes,
                                     out_bytes, xo_bufs)
    tb_budget = (budget - fixed) // max(per_row, 1)
    tb_budget = max(16, min((tb_budget // 16) * 16, 1024))
    b16 = _round_up(batch, 16)
    if b16 <= tb_budget:
        return b16                                  # single tile, no overshoot
    n_tiles = -(-b16 // tb_budget)                  # ceil
    return _round_up(-(-b16 // n_tiles), 16)


# ---------------------------------------------------------------------------
# Forward wrapper
# ---------------------------------------------------------------------------
def gottlieb_kan_forward(x, alpha, c0, ccat, gamma_p, beta_p, *, degree,
                         out_dim, use_layernorm, eps=1e-5,
                         out_dtype=jnp.float32):
    """x: (B, I); alpha: (1,) f32; remaining args from prepare_gottlieb_params.
    Returns (B, out_dim) in out_dtype.  x may be bf16 (DMA half the bytes;
    upcast to f32 in-kernel before the sigmoid)."""
    batch, in_dim = x.shape
    deg_eff = max(degree, 1)
    k_dim, o_pad = ccat.shape
    i_pad = k_dim // deg_eff
    assert i_pad >= in_dim and i_pad % _LANE == 0 and o_pad % _LANE == 0

    budget, limit_cap = _vmem_budget_and_limit()
    coeff_bytes = int(ccat.size) * ccat.dtype.itemsize
    x_bytes = x.dtype.itemsize
    out_bytes = np.dtype(out_dtype).itemsize

    # Size TB assuming double-buffered x/out, then re-check with deeper
    # buffering if the grid turns out long (mem-bound, short compute steps).
    tb = _choose_batch_tile(batch, i_pad, o_pad, coeff_bytes, budget,
                            x_bytes, out_bytes, xo_bufs=2)
    b_pad = _round_up(batch, tb)
    xo_bufs = 3 if (b_pad // tb) >= 4 else 2
    if xo_bufs == 3:
        tb = _choose_batch_tile(batch, i_pad, o_pad, coeff_bytes, budget,
                                x_bytes, out_bytes, xo_bufs=3)
        b_pad = _round_up(batch, tb)
    n_steps = b_pad // tb

    # TODO(synk): add an output-column / degree grid axis (f32 acc scratch +
    # pl.when init/finalize, reduction axis last & "arbitrary") for layers
    # whose resident coeffs exceed the VMEM budget (most pressing on v7x).

    x_p = jnp.pad(x, ((0, b_pad - batch), (0, i_pad - in_dim)))

    kernel = functools.partial(gottlieb_kan_kernel, degree=deg_eff,
                               i_pad=i_pad, out_dim=out_dim,
                               use_layernorm=use_layernorm, eps=eps)

    _, _, est_vmem = _working_set(tb, i_pad, o_pad, coeff_bytes, x_bytes,
                                  out_bytes, xo_bufs)
    vmem_limit = int(min(max(2 * est_vmem, 32 * 1024 * 1024), limit_cap))

    flops = 2 * b_pad * k_dim * o_pad + 6 * b_pad * i_pad * deg_eff
    bytes_accessed = (x_p.size * x_bytes + coeff_bytes
                      + (c0.size + gamma_p.size + beta_p.size) * 4
                      + b_pad * o_pad * out_bytes)

    def _spec(shape, index_map, mode):
        if mode is None:
            return pl.BlockSpec(shape, index_map)
        return pl.BlockSpec(shape, index_map, pipeline_mode=mode)

    def _run(use_pipeline_modes):
        resident = pl.Buffered(1) if use_pipeline_modes else None
        stream = (pl.Buffered(xo_bufs)
                  if (use_pipeline_modes and xo_bufs != 2) else None)
        grid_spec = pltpu.PrefetchScalarGridSpec(
            num_scalar_prefetch=0,
            grid=(n_steps,),
            in_specs=[
                pl.BlockSpec(memory_space=pltpu.MemorySpace.SMEM),  # alpha (1,)
                _spec((tb, i_pad), lambda b: (b, 0), stream),       # x tile
                _spec((1, o_pad), lambda b: (0, 0), resident),      # c0
                _spec((k_dim, o_pad), lambda b: (0, 0), resident),  # ccat
                _spec((1, o_pad), lambda b: (0, 0), resident),      # gamma
                _spec((1, o_pad), lambda b: (0, 0), resident),      # beta
            ],
            out_specs=_spec((tb, o_pad), lambda b: (b, 0), stream),
        )
        return pl.pallas_call(
            kernel,
            out_shape=jax.ShapeDtypeStruct((b_pad, o_pad), out_dtype),
            grid_spec=grid_spec,
            compiler_params=pltpu.CompilerParams(
                dimension_semantics=("parallel",),
                vmem_limit_bytes=vmem_limit),
            cost_estimate=pl.CostEstimate(
                flops=int(flops),
                transcendentals=int(b_pad * i_pad),
                bytes_accessed=int(bytes_accessed)),
        )(alpha, x_p, c0, ccat, gamma_p, beta_p)

    try:
        out_p = _run(True)
    except Exception:
        # Fallback: some Pallas builds reject pipeline_mode / Buffered(1);
        # default double-buffering is correct, just uses more VMEM.
        out_p = _run(False)

    return out_p[:batch, :out_dim]


# ---------------------------------------------------------------------------
# Pure-JAX reference matching the PyTorch module (f32 everywhere)
# ---------------------------------------------------------------------------
def _reference(x, alpha, coeffs, gamma, beta, *, degree, use_layernorm,
               eps=1e-5):
    s = jax.nn.sigmoid(x)
    a = alpha[0]
    basis = [jnp.ones_like(s)]
    if degree >= 1:
        basis.append(2.0 * a * s)
    for n in range(2, degree + 1):
        basis.append(2.0 * (a + n - 1) * s * basis[n - 1]
                     - (a + 2 * n - 2) * basis[n - 2])
    gb = jnp.stack(basis, axis=-1)                           # (B, I, D+1)
    y = jnp.einsum('bid,iod->bo', gb, coeffs)
    if use_layernorm:
        mean = jnp.mean(y, axis=-1, keepdims=True)
        var = jnp.mean((y - mean) ** 2, axis=-1, keepdims=True)
        y = (y - mean) * jax.lax.rsqrt(var + eps)
        y = y * gamma[None, :] + beta[None, :]
    return y


if __name__ == "__main__":
    # Small shapes consistent with the module's forward: x is (batch, input_dim).
    B, I, O, DEG = 8, 16, 32, 3
    use_layernorm = True

    key = jax.random.PRNGKey(0)
    k_x, k_alpha, k_coeffs = jax.random.split(key, 3)

    x = jax.random.normal(k_x, (B, I), dtype=jnp.float32)
    # Deterministic parameter init mirroring __init__:
    alpha = jax.random.normal(k_alpha, (1,), dtype=jnp.float32)        # torch.randn(1)
    coeffs = jax.random.normal(k_coeffs, (I, O, DEG + 1),
                               dtype=jnp.float32) * (1.0 / (I * (DEG + 1)))
    gamma = jnp.ones((O,), dtype=jnp.float32)                          # LayerNorm weight
    beta = jnp.zeros((O,), dtype=jnp.float32)                          # LayerNorm bias

    # One-time parameter re-layout (hoisted out of the per-call path).
    c0, ccat, gamma_p, beta_p = prepare_gottlieb_params(
        coeffs, gamma, beta, degree=DEG)

    out = gottlieb_kan_forward(x, alpha, c0, ccat, gamma_p, beta_p,
                               degree=DEG, out_dim=O,
                               use_layernorm=use_layernorm)
    out = jax.block_until_ready(out)

    ref = _reference(x, alpha, coeffs, gamma, beta,
                     degree=DEG, use_layernorm=use_layernorm)
    assert out.shape == (B, O)
    # bf16 MXU inputs (f32 accumulation) -> slightly loosened tolerance.
    assert jnp.allclose(out, ref, atol=3e-2, rtol=3e-2), (
        float(jnp.max(jnp.abs(out - ref))))

    print("KERNEL_OK")
</pallas_src>

<mosaic_0001>
module attributes {stable_mosaic.version = 11 : i64} {
  func.func @gottlieb_kan_kernel(%arg0: i32, %arg1: memref<1xf32, #tpu.memory_space<smem>>, %arg2: memref<16x128xf32, #tpu.memory_space<vmem>>, %arg3: memref<1x128xf32, #tpu.memory_space<vmem>>, %arg4: memref<384x128xbf16, #tpu.memory_space<vmem>>, %arg5: memref<1x128xf32, #tpu.memory_space<vmem>>, %arg6: memref<1x128xf32, #tpu.memory_space<vmem>>, %arg7: memref<16x128xf32, #tpu.memory_space<vmem>>) attributes {dimension_semantics = [#tpu.dimension_semantics<parallel>], iteration_bounds = array<i64: 1>, scalar_prefetch = 0 : i64, scratch_operands = 0 : i64, tpu.core_type = #tpu.core_type<tc>, window_params = [{transform_indices = @transform_0, window_bounds = array<i64: 1>}, {transform_indices = @transform_1, window_bounds = array<i64: 16, 128>}, {pipeline_mode = #tpu.pipeline_mode<synchronous>, transform_indices = @transform_2, window_bounds = array<i64: 1, 128>}, {pipeline_mode = #tpu.pipeline_mode<synchronous>, transform_indices = @transform_3, window_bounds = array<i64: 384, 128>}, {pipeline_mode = #tpu.pipeline_mode<synchronous>, transform_indices = @transform_4, window_bounds = array<i64: 1, 128>}, {pipeline_mode = #tpu.pipeline_mode<synchronous>, transform_indices = @transform_5, window_bounds = array<i64: 1, 128>}, {transform_indices = @transform_6, window_bounds = array<i64: 16, 128>}]} {
    %c0 = arith.constant 0 : index
    %0 = memref.load %arg1[%c0] : memref<1xf32, #tpu.memory_space<smem>>
    %c0_0 = arith.constant 0 : index
    %c0_1 = arith.constant 0 : index
    %1 = vector.load %arg2[%c0_0, %c0_1] : memref<16x128xf32, #tpu.memory_space<vmem>>, vector<16x128xf32>
    %2 = arith.negf %1 : vector<16x128xf32>
    %3 = math.exp %2 : vector<16x128xf32>
    %cst = arith.constant 1.000000e+00 : f32
    %4 = vector.broadcast %cst : f32 to vector<16x128xf32>
    %5 = arith.addf %4, %3 : vector<16x128xf32>
    %6 = arith.divf %4, %5 : vector<16x128xf32>
    %cst_2 = arith.constant 1.000000e+00 : f32
    %7 = vector.broadcast %cst_2 : f32 to vector<16x128xf32>
    %cst_3 = arith.constant 2.000000e+00 : f32
    %8 = arith.mulf %cst_3, %0 : f32
    %9 = vector.broadcast %8 : f32 to vector<16x128xf32>
    %10 = arith.mulf %9, %6 : vector<16x128xf32>
    %c0_4 = arith.constant 0 : index
    %c0_5 = arith.constant 0 : index
    %11 = vector.load %arg3[%c0_4, %c0_5] : memref<1x128xf32, #tpu.memory_space<vmem>>, vector<1x128xf32>
    %12 = arith.truncf %10 : vector<16x128xf32> to vector<16x128xbf16>
    %c0_6 = arith.constant 0 : index
    %c0_7 = arith.constant 0 : index
    %13 = vector.load %arg4[%c0_6, %c0_7] : memref<384x128xbf16, #tpu.memory_space<vmem>>, vector<128x128xbf16>
    %cst_8 = arith.constant dense<0.000000e+00> : vector<16x128xf32>
    %14 = tpu.matmul %12, %13, %cst_8 {dimension_numbers = #tpu.dot_dimension_numbers<[1], [0], [0], [1], [0, 0, 1, 1], [], []>} : vector<16x128xbf16>, vector<128x128xbf16>, vector<16x128xf32> -> vector<16x128xf32>
    %15 = vector.broadcast %11 : vector<1x128xf32> to vector<16x128xf32>
    %16 = arith.addf %15, %14 : vector<16x128xf32>
    %cst_9 = arith.constant 1.000000e+00 : f32
    %17 = arith.addf %0, %cst_9 : f32
    %cst_10 = arith.constant 2.000000e+00 : f32
    %18 = arith.mulf %cst_10, %17 : f32
    %19 = vector.broadcast %18 : f32 to vector<16x128xf32>
    %20 = arith.mulf %19, %6 : vector<16x128xf32>
    %21 = arith.mulf %20, %10 : vector<16x128xf32>
    %cst_11 = arith.constant 2.000000e+00 : f32
    %22 = arith.addf %0, %cst_11 : f32
    %23 = vector.broadcast %22 : f32 to vector<16x128xf32>
    %24 = arith.mulf %23, %7 : vector<16x128xf32>
    %25 = arith.subf %21, %24 : vector<16x128xf32>
    %26 = arith.truncf %25 : vector<16x128xf32> to vector<16x128xbf16>
    %c128 = arith.constant 128 : index
    %c0_12 = arith.constant 0 : index
    %27 = vector.load %arg4[%c128, %c0_12] : memref<384x128xbf16, #tpu.memory_space<vmem>>, vector<128x128xbf16>
    %cst_13 = arith.constant dense<0.000000e+00> : vector<16x128xf32>
    %28 = tpu.matmul %26, %27, %cst_13 {dimension_numbers = #tpu.dot_dimension_numbers<[1], [0], [0], [1], [0, 0, 1, 1], [], []>} : vector<16x128xbf16>, vector<128x128xbf16>, vector<16x128xf32> -> vector<16x128xf32>
    %29 = arith.addf %16, %28 : vector<16x128xf32>
    %cst_14 = arith.constant 2.000000e+00 : f32
    %30 = arith.addf %0, %cst_14 : f32
    %cst_15 = arith.constant 2.000000e+00 : f32
    %31 = arith.mulf %cst_15, %30 : f32
    %32 = vector.broadcast %31 : f32 to vector<16x128xf32>
    %33 = arith.mulf %32, %6 : vector<16x128xf32>
    %34 = arith.mulf %33, %25 : vector<16x128xf32>
    %cst_16 = arith.constant 4.000000e+00 : f32
    %35 = arith.addf %0, %cst_16 : f32
    %36 = vector.broadcast %35 : f32 to vector<16x128xf32>
    %37 = arith.mulf %36, %10 : vector<16x128xf32>
    %38 = arith.subf %34, %37 : vector<16x128xf32>
    %39 = arith.truncf %38 : vector<16x128xf32> to vector<16x128xbf16>
    %c256 = arith.constant 256 : index
    %c0_17 = arith.constant 0 : index
    %40 = vector.load %arg4[%c256, %c0_17] : memref<384x128xbf16, #tpu.memory_space<vmem>>, vector<128x128xbf16>
    %cst_18 = arith.constant dense<0.000000e+00> : vector<16x128xf32>
    %41 = tpu.matmul %39, %40, %cst_18 {dimension_numbers = #tpu.dot_dimension_numbers<[1], [0], [0], [1], [0, 0, 1, 1], [], []>} : vector<16x128xbf16>, vector<128x128xbf16>, vector<16x128xf32> -> vector<16x128xf32>
    %42 = arith.addf %29, %41 : vector<16x128xf32>
    %43 = tpu.iota {dimensions = array<i32: 1>} : vector<16x128xi32>
    %c32_i32 = arith.constant 32 : i32
    %44 = vector.broadcast %c32_i32 : i32 to vector<16x128xi32>
    %45 = arith.cmpi slt, %43, %44 : vector<16x128xi32>
    %cst_19 = arith.constant 0.000000e+00 : f32
    %46 = vector.broadcast %cst_19 : f32 to vector<16x128xf32>
    %47 = arith.select %45, %42, %46 : vector<16x128xi1>, vector<16x128xf32>
    %cst_20 = arith.constant dense<0.000000e+00> : vector<16xf32>
    %48 = vector.multi_reduction <add>, %47, %cst_20 [1] : vector<16x128xf32> to vector<16xf32>
    %49 = vector.shape_cast %48 : vector<16xf32> to vector<16x1xf32>
    %cst_21 = arith.constant 3.125000e-02 : f32
    %50 = vector.broadcast %cst_21 : f32 to vector<16x1xf32>
    %51 = arith.mulf %49, %50 : vector<16x1xf32>
    %52 = vector.broadcast %51 : vector<16x1xf32> to vector<16x128xf32>
    %53 = arith.subf %42, %52 : vector<16x128xf32>
    %cst_22 = arith.constant 0.000000e+00 : f32
    %54 = vector.broadcast %cst_22 : f32 to vector<16x128xf32>
    %55 = arith.select %45, %53, %54 : vector<16x128xi1>, vector<16x128xf32>
    %56 = arith.mulf %55, %55 : vector<16x128xf32>
    %cst_23 = arith.constant dense<0.000000e+00> : vector<16xf32>
    %57 = vector.multi_reduction <add>, %56, %cst_23 [1] : vector<16x128xf32> to vector<16xf32>
    %58 = vector.shape_cast %57 : vector<16xf32> to vector<16x1xf32>
    %cst_24 = arith.constant 3.125000e-02 : f32
    %59 = vector.broadcast %cst_24 : f32 to vector<16x1xf32>
    %60 = arith.mulf %58, %59 : vector<16x1xf32>
    %cst_25 = arith.constant 9.99999974E-6 : f32
    %61 = vector.broadcast %cst_25 : f32 to vector<16x1xf32>
    %62 = arith.addf %60, %61 : vector<16x1xf32>
    %63 = math.rsqrt %62 : vector<16x1xf32>
    %64 = vector.broadcast %63 : vector<16x1xf32> to vector<16x128xf32>
    %65 = arith.mulf %55, %64 : vector<16x128xf32>
    %c0_26 = arith.constant 0 : index
    %c0_27 = arith.constant 0 : index
    %66 = vector.load %arg5[%c0_26, %c0_27] : memref<1x128xf32, #tpu.memory_space<vmem>>, vector<1x128xf32>
    %67 = vector.broadcast %66 : vector<1x128xf32> to vector<16x128xf32>
    %68 = arith.mulf %65, %67 : vector<16x128xf32>
    %c0_28 = arith.constant 0 : index
    %c0_29 = arith.constant 0 : index
    %69 = vector.load %arg6[%c0_28, %c0_29] : memref<1x128xf32, #tpu.memory_space<vmem>>, vector<1x128xf32>
    %70 = vector.broadcast %69 : vector<1x128xf32> to vector<16x128xf32>
    %71 = arith.addf %68, %70 : vector<16x128xf32>
    %c0_30 = arith.constant 0 : index
    %c0_31 = arith.constant 0 : index
    %72 = vector.load %arg7[%c0_30, %c0_31] : memref<16x128xf32, #tpu.memory_space<vmem>>, vector<16x128xf32>
    tpu.vector_store %arg7[%c0_30, %c0_31], %71 {strides = array<i32>} : memref<16x128xf32, #tpu.memory_space<vmem>>, vector<16x128xf32>,
    return
  }
  func.func @transform_0(%arg0: i32) -> i32 {
    %c0_i32 = arith.constant 0 : i32
    %c0_i32_0 = arith.constant 0 : i32
    return %c0_i32 : i32
  }
  func.func @transform_1(%arg0: i32) -> (i32, i32) {
    %c0_i32 = arith.constant 0 : i32
    %c0_i32_0 = arith.constant 0 : i32
    return %arg0, %c0_i32 : i32, i32
  }
  func.func @transform_2(%arg0: i32) -> (i32, i32) {
    %c0_i32 = arith.constant 0 : i32
    %c0_i32_0 = arith.constant 0 : i32
    %c0_i32_1 = arith.constant 0 : i32
    return %c0_i32, %c0_i32_0 : i32, i32
  }
  func.func @transform_3(%arg0: i32) -> (i32, i32) {
    %c0_i32 = arith.constant 0 : i32
    %c0_i32_0 = arith.constant 0 : i32
    %c0_i32_1 = arith.constant 0 : i32
    return %c0_i32, %c0_i32_0 : i32, i32
  }
  func.func @transform_4(%arg0: i32) -> (i32, i32) {
    %c0_i32 = arith.constant 0 : i32
    %c0_i32_0 = arith.constant 0 : i32
    %c0_i32_1 = arith.constant 0 : i32
    return %c0_i32, %c0_i32_0 : i32, i32
  }
  func.func @transform_5(%arg0: i32) -> (i32, i32) {
    %c0_i32 = arith.constant 0 : i32
    %c0_i32_0 = arith.constant 0 : i32
    %c0_i32_1 = arith.constant 0 : i32
    return %c0_i32, %c0_i32_0 : i32, i32
  }
  func.func @transform_6(%arg0: i32) -> (i32, i32) {
    %c0_i32 = arith.constant 0 : i32
    %c0_i32_0 = arith.constant 0 : i32
    return %arg0, %c0_i32 : i32, i32
  }
}

module attributes {stable_mosaic.version = 11 : i64} {
  func.func @gottlieb_kan_kernel(%arg0: i32, %arg1: memref<1xf32, #tpu.memory_space<smem>>, %arg2: memref<16x128xf32, #tpu.memory_space<vmem>>, %arg3: memref<1x128xf32, #tpu.memory_space<vmem>>, %arg4: memref<384x128xbf16, #tpu.memory_space<vmem>>, %arg5: memref<1x128xf32, #tpu.memory_space<vmem>>, %arg6: memref<1x128xf32, #tpu.memory_space<vmem>>, %arg7: memref<16x128xf32, #tpu.memory_space<vmem>>) attributes {dimension_semantics = [#tpu.dimension_semantics<parallel>], iteration_bounds = array<i64: 1>, scalar_prefetch = 0 : i64, scratch_operands = 0 : i64, tpu.core_type = #tpu.core_type<tc>, window_params = [{transform_indices = @transform_0, window_bounds = array<i64: 1>}, {transform_indices = @transform_1, window_bounds = array<i64: 16, 128>}, {pipeline_mode = #tpu.pipeline_mode<synchronous>, transform_indices = @transform_2, window_bounds = array<i64: 1, 128>}, {pipeline_mode = #tpu.pipeline_mode<synchronous>, transform_indices = @transform_3, window_bounds = array<i64: 384, 128>}, {pipeline_mode = #tpu.pipeline_mode<synchronous>, transform_indices = @transform_4, window_bounds = array<i64: 1, 128>}, {pipeline_mode = #tpu.pipeline_mode<synchronous>, transform_indices = @transform_5, window_bounds = array<i64: 1, 128>}, {transform_indices = @transform_6, window_bounds = array<i64: 16, 128>}]} {
    %c0 = arith.constant 0 : index
    %0 = memref.load %arg1[%c0] : memref<1xf32, #tpu.memory_space<smem>>
    %c0_0 = arith.constant 0 : index
    %c0_1 = arith.constant 0 : index
    %1 = vector.load %arg2[%c0_0, %c0_1] : memref<16x128xf32, #tpu.memory_space<vmem>>, vector<16x128xf32>
    %2 = arith.negf %1 : vector<16x128xf32>
    %3 = math.exp %2 : vector<16x128xf32>
    %cst = arith.constant 1.000000e+00 : f32
    %4 = vector.broadcast %cst : f32 to vector<16x128xf32>
    %5 = arith.addf %4, %3 : vector<16x128xf32>
    %6 = arith.divf %4, %5 : vector<16x128xf32>
    %cst_2 = arith.constant 1.000000e+00 : f32
    %7 = vector.broadcast %cst_2 : f32 to vector<16x128xf32>
    %cst_3 = arith.constant 2.000000e+00 : f32
    %8 = arith.mulf %cst_3, %0 : f32
    %9 = vector.broadcast %8 : f32 to vector<16x128xf32>
    %10 = arith.mulf %9, %6 : vector<16x128xf32>
    %c0_4 = arith.constant 0 : index
    %c0_5 = arith.constant 0 : index
    %11 = vector.load %arg3[%c0_4, %c0_5] : memref<1x128xf32, #tpu.memory_space<vmem>>, vector<1x128xf32>
    %12 = arith.truncf %10 : vector<16x128xf32> to vector<16x128xbf16>
    %c0_6 = arith.constant 0 : index
    %c0_7 = arith.constant 0 : index
    %13 = vector.load %arg4[%c0_6, %c0_7] : memref<384x128xbf16, #tpu.memory_space<vmem>>, vector<128x128xbf16>
    %cst_8 = arith.constant dense<0.000000e+00> : vector<16x128xf32>
    %14 = tpu.matmul %12, %13, %cst_8 {dimension_numbers = #tpu.dot_dimension_numbers<[1], [0], [0], [1], [0, 0, 1, 1], [], []>} : vector<16x128xbf16>, vector<128x128xbf16>, vector<16x128xf32> -> vector<16x128xf32>
    %15 = vector.broadcast %11 : vector<1x128xf32> to vector<16x128xf32>
    %16 = arith.addf %15, %14 : vector<16x128xf32>
    %cst_9 = arith.constant 1.000000e+00 : f32
    %17 = arith.addf %0, %cst_9 : f32
    %cst_10 = arith.constant 2.000000e+00 : f32
    %18 = arith.mulf %cst_10, %17 : f32
    %19 = vector.broadcast %18 : f32 to vector<16x128xf32>
    %20 = arith.mulf %19, %6 : vector<16x128xf32>
    %21 = arith.mulf %20, %10 : vector<16x128xf32>
    %cst_11 = arith.constant 2.000000e+00 : f32
    %22 = arith.addf %0, %cst_11 : f32
    %23 = vector.broadcast %22 : f32 to vector<16x128xf32>
    %24 = arith.mulf %23, %7 : vector<16x128xf32>
    %25 = arith.subf %21, %24 : vector<16x128xf32>
    %26 = arith.truncf %25 : vector<16x128xf32> to vector<16x128xbf16>
    %c128 = arith.constant 128 : index
    %c0_12 = arith.constant 0 : index
    %27 = vector.load %arg4[%c128, %c0_12] : memref<384x128xbf16, #tpu.memory_space<vmem>>, vector<128x128xbf16>
    %cst_13 = arith.constant dense<0.000000e+00> : vector<16x128xf32>
    %28 = tpu.matmul %26, %27, %cst_13 {dimension_numbers = #tpu.dot_dimension_numbers<[1], [0], [0], [1], [0, 0, 1, 1], [], []>} : vector<16x128xbf16>, vector<128x128xbf16>, vector<16x128xf32> -> vector<16x128xf32>
    %29 = arith.addf %16, %28 : vector<16x128xf32>
    %cst_14 = arith.constant 2.000000e+00 : f32
    %30 = arith.addf %0, %cst_14 : f32
    %cst_15 = arith.constant 2.000000e+00 : f32
    %31 = arith.mulf %cst_15, %30 : f32
    %32 = vector.broadcast %31 : f32 to vector<16x128xf32>
    %33 = arith.mulf %32, %6 : vector<16x128xf32>
    %34 = arith.mulf %33, %25 : vector<16x128xf32>
    %cst_16 = arith.constant 4.000000e+00 : f32
    %35 = arith.addf %0, %cst_16 : f32
    %36 = vector.broadcast %35 : f32 to vector<16x128xf32>
    %37 = arith.mulf %36, %10 : vector<16x128xf32>
    %38 = arith.subf %34, %37 : vector<16x128xf32>
    %39 = arith.truncf %38 : vector<16x128xf32> to vector<16x128xbf16>
    %c256 = arith.constant 256 : index
    %c0_17 = arith.constant 0 : index
    %40 = vector.load %arg4[%c256, %c0_17] : memref<384x128xbf16, #tpu.memory_space<vmem>>, vector<128x128xbf16>
    %cst_18 = arith.constant dense<0.000000e+00> : vector<16x128xf32>
    %41 = tpu.matmul %39, %40, %cst_18 {dimension_numbers = #tpu.dot_dimension_numbers<[1], [0], [0], [1], [0, 0, 1, 1], [], []>} : vector<16x128xbf16>, vector<128x128xbf16>, vector<16x128xf32> -> vector<16x128xf32>
    %42 = arith.addf %29, %41 : vector<16x128xf32>
    %43 = tpu.iota {dimensions = array<i32: 1>} : vector<16x128xi32>
    %c32_i32 = arith.constant 32 : i32
    %44 = vector.broadcast %c32_i32 : i32 to vector<16x128xi32>
    %45 = arith.cmpi slt, %43, %44 : vector<16x128xi32>
    %cst_19 = arith.constant 0.000000e+00 : f32
    %46 = vector.broadcast %cst_19 : f32 to vector<16x128xf32>
    %47 = arith.select %45, %42, %46 : vector<16x128xi1>, vector<16x128xf32>
    %cst_20 = arith.constant dense<0.000000e+00> : vector<16xf32>
    %48 = vector.multi_reduction <add>, %47, %cst_20 [1] : vector<16x128xf32> to vector<16xf32>
    %49 = vector.shape_cast %48 : vector<16xf32> to vector<16x1xf32>
    %cst_21 = arith.constant 3.125000e-02 : f32
    %50 = vector.broadcast %cst_21 : f32 to vector<16x1xf32>
    %51 = arith.mulf %49, %50 : vector<16x1xf32>
    %52 = vector.broadcast %51 : vector<16x1xf32> to vector<16x128xf32>
    %53 = arith.subf %42, %52 : vector<16x128xf32>
    %cst_22 = arith.constant 0.000000e+00 : f32
    %54 = vector.broadcast %cst_22 : f32 to vector<16x128xf32>
    %55 = arith.select %45, %53, %54 : vector<16x128xi1>, vector<16x128xf32>
    %56 = arith.mulf %55, %55 : vector<16x128xf32>
    %cst_23 = arith.constant dense<0.000000e+00> : vector<16xf32>
    %57 = vector.multi_reduction <add>, %56, %cst_23 [1] : vector<16x128xf32> to vector<16xf32>
    %58 = vector.shape_cast %57 : vector<16xf32> to vector<16x1xf32>
    %cst_24 = arith.constant 3.125000e-02 : f32
    %59 = vector.broadcast %cst_24 : f32 to vector<16x1xf32>
    %60 = arith.mulf %58, %59 : vector<16x1xf32>
    %cst_25 = arith.constant 9.99999974E-6 : f32
    %61 = vector.broadcast %cst_25 : f32 to vector<16x1xf32>
    %62 = arith.addf %60, %61 : vector<16x1xf32>
    %63 = math.rsqrt %62 : vector<16x1xf32>
    %64 = vector.broadcast %63 : vector<16x1xf32> to vector<16x128xf32>
    %65 = arith.mulf %55, %64 : vector<16x128xf32>
    %c0_26 = arith.constant 0 : index
    %c0_27 = arith.constant 0 : index
    %66 = vector.load %arg5[%c0_26, %c0_27] : memref<1x128xf32, #tpu.memory_space<vmem>>, vector<1x128xf32>
    %67 = vector.broadcast %66 : vector<1x128xf32> to vector<16x128xf32>
    %68 = arith.mulf %65, %67 : vector<16x128xf32>
    %c0_28 = arith.constant 0 : index
    %c0_29 = arith.constant 0 : index
    %69 = vector.load %arg6[%c0_28, %c0_29] : memref<1x128xf32, #tpu.memory_space<vmem>>, vector<1x128xf32>
    %70 = vector.broadcast %69 : vector<1x128xf32> to vector<16x128xf32>
    %71 = arith.addf %68, %70 : vector<16x128xf32>
    %c0_30 = arith.constant 0 : index
    %c0_31 = arith.constant 0 : index
    %72 = vector.load %arg7[%c0_30, %c0_31] : memref<16x128xf32, #tpu.memory_space<vmem>>, vector<16x128xf32>
    tpu.vector_store %arg7[%c0_30, %c0_31], %71 {strides = array<i32>} : memref<16x128xf32, #tpu.memory_space<vmem>>, vector<16x128xf32>,
    return
  }
  func.func @transform_0(%arg0: i32) -> i32 {
    %c0_i32 = arith.constant 0 : i32
    %c0_i32_0 = arith.constant 0 : i32
    return %c0_i32 : i32
  }
  func.func @transform_1(%arg0: i32) -> (i32, i32) {
    %c0_i32 = arith.constant 0 : i32
    %c0_i32_0 = arith.constant 0 : i32
    return %arg0, %c0_i32 : i32, i32
  }
  func.func @transform_2(%arg0: i32) -> (i32, i32) {
    %c0_i32 = arith.constant 0 : i32
    %c0_i32_0 = arith.constant 0 : i32
    %c0_i32_1 = arith.constant 0 : i32
    return %c0_i32, %c0_i32_0 : i32, i32
  }
  func.func @transform_3(%arg0: i32) -> (i32, i32) {
    %c0_i32 = arith.constant 0 : i32
    %c0_i32_0 = arith.constant 0 : i32
    %c0_i32_1 = arith.constant 0 : i32
    return %c0_i32, %c0_i32_0 : i32, i32
  }
  func.func @transform_4(%arg0: i32) -> (i32, i32) {
    %c0_i32 = arith.constant 0 : i32
    %c0_i32_0 = arith.constant 0 : i32
    %c0_i32_1 = arith.constant 0 : i32
    return %c0_i32, %c0_i32_0 : i32, i32
  }
  func.func @transform_5(%arg0: i32) -> (i32, i32) {
    %c0_i32 = arith.constant 0 : i32
    %c0_i32_0 = arith.constant 0 : i32
    %c0_i32_1 = arith.constant 0 : i32
    return %c0_i32, %c0_i32_0 : i32, i32
  }
  func.func @transform_6(%arg0: i32) -> (i32, i32) {
    %c0_i32 = arith.constant 0 : i32
    %c0_i32_0 = arith.constant 0 : i32
    return %arg0, %c0_i32 : i32, i32
  }
}

</mosaic_0001>

<llo_original>
// kernel: tpu_custom_call.1
$region0: #{tpu_custom_call.1}
  #allocation0 [shape = 'u32[]', space=smem, size = 0x4, offset = 0x4, fixed_abs, tag = 'smem constant byte address 0x4 - core index']
  #allocation1 [shape = 'u32[72,128]{1,0:T(1,128)}', space=vmem, size = 0x9000, scoped, tag = 'internal scratch']
  #allocation2 [shape = 'f32[1]{0:T(128)S(6)}', space=smem, size = 0x200, scoped, tag = 'scoped memory for tpu_custom_call.1']
  %s0 = inlined_call_operand.<no memory space> [shape: f32[1], index: 0, kind: input, shape index: {}]
  %s1 = inlined_call_operand.hbm [shape: f32[16,128], index: 1, kind: input, shape index: {}]
  %s2 = inlined_call_operand.vmem [shape: f32[1,128], index: 2, kind: input, shape index: {}]
  %s3 = inlined_call_operand.hbm [shape: bf16[384,128], index: 3, kind: input, shape index: {}]
  %s4 = inlined_call_operand.vmem [shape: f32[1,128], index: 4, kind: input, shape index: {}]
  %s5 = inlined_call_operand.vmem [shape: f32[1,128], index: 5, kind: input, shape index: {}]
  %s6 = inlined_call_operand.hbm [shape: f32[16,128], index: 6, kind: output, shape index: {}]
  %s7 = sld [smem:[#allocation0]]
  $region42: #{tpu_custom_call.1} parent=0
    _
  %s9 = ssub.s32 1, %s7
  %s10 = scalar_select 0, %s9, %s7
  %11 = sst [smem:[#allocation2]] %s0
  $region1: #{tpu_custom_call.1} parent=0
    #allocation3 [shape = 'u8[8192]{0}', space=vmem, size = 0x2000, scoped, tag = 'input window, operand 1, single buffered']
    #allocation4 [shape = 's32[1]{0}', space=sflag, size = 0x4, scoped, tag = 'scoped memory for tpu_custom_call.1']
    #allocation5 [shape = 's32[1]{0}', space=sflag, size = 0x4, scoped, tag = 'scoped memory for tpu_custom_call.1']
    #allocation6 [shape = 'u8[98304]{0}', space=vmem, size = 0x18000, scoped, tag = 'input window, operand 3, single buffered']
    #allocation7 [shape = 's32[1]{0}', space=sflag, size = 0x4, scoped, tag = 'scoped memory for tpu_custom_call.1']
    #allocation8 [shape = 'u8[8192]{0}', space=vmem, size = 0x2000, scoped, tag = 'output window, operand 0, single buffered']
    %12 = vsyncpa [#allocation4], 0
    %13 = vsyncpa [#allocation7], 0
    %14 = vsyncpa [#allocation5], 0
    // Predicated region
    $region2: #{tpu_custom_call.1} parent=1 // pred_check
      _
    $region3: #{tpu_custom_call.1} parent=1 // pred_check_branch
      %16 = sbr.rel (0) target = $region5
    $region4: #{tpu_custom_call.1} parent=1 // pred_region
      _
    $region5: #{tpu_custom_call.1} parent=1 // pred_fallthru
      _
    // Predicated region
    $region6: #{tpu_custom_call.1} parent=1 // pred_check
      _
    $region7: #{tpu_custom_call.1} parent=1 // pred_check_branch
      %18 = sbr.rel (0) target = $region9
    $region8: #{tpu_custom_call.1} parent=1 // pred_region
      %20 = vsyncadd [#allocation4], 0
      %s21 = sshll.u32 %s1, 4
      %s22 = int_to_ptr.hbm [resolvable:$true] %s21
      %s23 = sshll.u32 [#allocation3], 4
      %s24 = int_to_ptr.vmem [resolvable:$true] %s23
      %29 = dma.hbm_to_vmem [thread:$0]  %s22, 256, %s24, [#allocation4], 128, 128, 8
    $region9: #{tpu_custom_call.1} parent=1 // pred_fallthru
      _
    // Predicated region
    $region10: #{tpu_custom_call.1} parent=1 // pred_check
      _
    $region11: #{tpu_custom_call.1} parent=1 // pred_check_branch
      %31 = sbr.rel (0) target = $region13
    $region12: #{tpu_custom_call.1} parent=1 // pred_region
      _
    $region13: #{tpu_custom_call.1} parent=1 // pred_fallthru
      _
    // Predicated region
    $region14: #{tpu_custom_call.1} parent=1 // pred_check
      _
    $region15: #{tpu_custom_call.1} parent=1 // pred_check_branch
      %33 = sbr.rel (0) target = $region17
    $region16: #{tpu_custom_call.1} parent=1 // pred_region
      %35 = vsyncadd [#allocation7], 0
      %s36 = sshll.u32 %s3, 4
      %s37 = int_to_ptr.hbm [resolvable:$true] %s36
      %s38 = sshll.u32 [#allocation6], 4
      %s39 = int_to_ptr.vmem [resolvable:$true] %s38
      %44 = dma.hbm_to_vmem [thread:$0]  %s37, 3072, %s39, [#allocation7], 64, 64, 4
    $region17: #{tpu_custom_call.1} parent=1 // pred_fallthru
      _
    // Predicated region
    $region18: #{tpu_custom_call.1} parent=1 // pred_check
      _
    $region19: #{tpu_custom_call.1} parent=1 // pred_check_branch
      %46 = sbr.rel (0) target = $region21
    $region20: #{tpu_custom_call.1} parent=1 // pred_region
      _
    $region21: #{tpu_custom_call.1} parent=1 // pred_fallthru
      _
    // Predicated region
    $region22: #{tpu_custom_call.1} parent=1 // pred_check
      _
    $region23: #{tpu_custom_call.1} parent=1 // pred_check_branch
      %48 = sbr.rel (0) target = $region25
    $region24: #{tpu_custom_call.1} parent=1 // pred_region
      _
    $region25: #{tpu_custom_call.1} parent=1 // pred_fallthru
      _
    // Predicated region
    $region26: #{tpu_custom_call.1} parent=1 // pred_check
      _
    $region27: #{tpu_custom_call.1} parent=1 // pred_check_branch
      %50 = sbr.rel (0) target = $region29
    $region28: #{tpu_custom_call.1} parent=1 // pred_region
      %52 = dma.done [#allocation4], 256
    $region29: #{tpu_custom_call.1} parent=1 // pred_fallthru
      _
    // Predicated region
    $region30: #{tpu_custom_call.1} parent=1 // pred_check
      _
    $region31: #{tpu_custom_call.1} parent=1 // pred_check_branch
      %54 = sbr.rel (0) target = $region33
    $region32: #{tpu_custom_call.1} parent=1 // pred_region
      %56 = dma.done [#allocation7], 3072
    $region33: #{tpu_custom_call.1} parent=1 // pred_fallthru
      _
    %s57 = sld [smem:[#allocation2]]
    %v58 = vld [vmem:[#allocation3] sm:$0xff]
    %v59 = vld [vmem:[#allocation3 + $0x8] sm:$0xff]
    %v60 = vxor.u32 %v58, 2147483648
    %v61 = vxor.u32 %v59, 2147483648
    %v62 = vmul.f32 %v60, 1.442695
    %v63 = vpow.pop %v62
    %v64 = vmul.f32 %v61, 1.442695
    %v65 = vpow.pop %v64
    %v66 = vadd.f32 %v63, 1.0
    %v67 = vadd.f32 %v65, 1.0
    %v68 = vrcp.pop %v66
    %v69 = vmul.f32 %v66, %v68
    %v70 = vsub.f32 1.0, %v69
    %v71 = vmul.f32 %v68, %v70
    %v72 = vadd.f32 %v68, %v71
    %vm73 = vweird.f32 %v66
    %vm74 = vweird.f32 %v68
    %vm75 = vmor %vm73, %vm74
    %v76 = vsel %vm75, %v68, %v72
    %v77 = vand.u32 2147483647, %v66
    %vm78 = vcmp.eq.f32.partialorder %v77, 8.507059e+37
    %v79 = vand.u32 %v66, 2147483648
    %v80 = vor.u32 1.1754944e-38, %v79
    %v81 = vsel %vm78, %v80, %v76
    %v82 = vmul.f32 1.0, %v81
    %v83 = vrcp.pop %v67
    %v84 = vmul.f32 %v67, %v83
    %v85 = vsub.f32 1.0, %v84
    %v86 = vmul.f32 %v83, %v85
    %v87 = vadd.f32 %v83, %v86
    %vm88 = vweird.f32 %v67
    %vm89 = vweird.f32 %v83
    %vm90 = vmor %vm88, %vm89
    %v91 = vsel %vm90, %v83, %v87
    %v92 = vand.u32 2147483647, %v67
    %vm93 = vcmp.eq.f32.partialorder %v92, 8.507059e+37
    %v94 = vand.u32 %v67, 2147483648
    %v95 = vor.u32 1.1754944e-38, %v94
    %v96 = vsel %vm93, %v95, %v91
    %v97 = vmul.f32 1.0, %v96
    %s98 = smul.f32 %s57, 2.0
    %v99 = vstv %s98
    %v100 = vmul.f32 %v99, %v82
    %v101 = vmul.f32 %v99, %v97
    %v102 = vld [vmem:[%s2] sm:$0x1]
    %v103 = vpack.c.bf16 %v101, %v100
    %v104 = vld [vmem:[#allocation6] sm:$0xf]
    %v105 = vld [vmem:[#allocation6 + $0x4] sm:$0xf]
    %v106 = vld [vmem:[#allocation6 + $0x8] sm:$0xf]
    %v107 = vld [vmem:[#allocation6 + $0xc] sm:$0xf]
    %v108 = vld [vmem:[#allocation6 + $0x10] sm:$0xf]
    %v109 = vld [vmem:[#allocation6 + $0x14] sm:$0xf]
    %v110 = vld [vmem:[#allocation6 + $0x18] sm:$0xf]
    %v111 = vld [vmem:[#allocation6 + $0x1c] sm:$0xf]
    %v112 = vld [vmem:[#allocation6 + $0x20] sm:$0xf]
    %v113 = vld [vmem:[#allocation6 + $0x24] sm:$0xf]
    %v114 = vld [vmem:[#allocation6 + $0x28] sm:$0xf]
    %v115 = vld [vmem:[#allocation6 + $0x2c] sm:$0xf]
    %v116 = vld [vmem:[#allocation6 + $0x30] sm:$0xf]
    %v117 = vld [vmem:[#allocation6 + $0x34] sm:$0xf]
    %v118 = vld [vmem:[#allocation6 + $0x38] sm:$0xf]
    %v119 = vld [vmem:[#allocation6 + $0x3c] sm:$0xf]
    %v136 = vunpack.c.l.b16 %v104
    %v137 = vunpack.c.l.b16 %v105
    %v138 = vunpack.c.l.b16 %v106
    %v139 = vunpack.c.l.b16 %v107
    %v140 = vunpack.c.l.b16 %v108
    %v141 = vunpack.c.l.b16 %v109
    %v142 = vunpack.c.l.b16 %v110
    %v143 = vunpack.c.l.b16 %v111
    %v144 = vunpack.c.l.b16 %v112
    %v145 = vunpack.c.l.b16 %v113
    %v146 = vunpack.c.l.b16 %v114
    %v147 = vunpack.c.l.b16 %v115
    %v148 = vunpack.c.l.b16 %v116
    %v149 = vunpack.c.l.b16 %v117
    %v150 = vunpack.c.l.b16 %v118
    %v151 = vunpack.c.l.b16 %v119
    %v152 = vpack.c.b16 %v137, %v136
    %v153 = vpack.c.b16 %v139, %v138
    %v154 = vpack.c.b16 %v141, %v140
    %v155 = vpack.c.b16 %v143, %v142
    %v156 = vpack.c.b16 %v145, %v144
    %v157 = vpack.c.b16 %v147, %v146
    %v158 = vpack.c.b16 %v149, %v148
    %v159 = vpack.c.b16 %v151, %v150
    %168 = vmatpush.bf16.msra.mxu0 %v159
    %169 = vmatpush.bf16.msra.mxu0 %v158
    %170 = vmatpush.bf16.msra.mxu0 %v157
    %171 = vmatpush.bf16.msra.mxu0 %v156
    %172 = vmatpush.bf16.msra.mxu0 %v155
    %173 = vmatpush.bf16.msra.mxu0 %v154
    %174 = vmatpush.bf16.msra.mxu0 %v153
    %175 = vmatpush.bf16.msra.mxu0 %v152
    %176 = vmatmul.bf16.gmra.mxu0 %v103
    %v177 = vpop.f32.mrf.mxu0
    %v178 = vadd.f32 0.0, %v177
    %v179 = vpop.f32.mrf.mxu0
    %v180 = vadd.f32 0.0, %v179
    %181 = vdwg.mxu0
    %v183 = vperm.slane %v102, 0
    %v185 = vadd.f32 %v183, %v178
    %v186 = vadd.f32 %v183, %v180
    %s187 = sadd.f32 %s57, 1.0
    %s188 = smul.f32 %s187, 2.0
    %v189 = vstv %s188
    %v190 = vmul.f32 %v189, %v82
    %v191 = vmul.f32 %v189, %v97
    %v192 = vmul.f32 %v190, %v100
    %v193 = vmul.f32 %v191, %v101
    %s194 = sadd.f32 %s57, 2.0
    %v195 = vstv %s194
    %v196 = vsub.f32 %v192, %v195
    %v197 = vsub.f32 %v193, %v195
    %v198 = vpack.c.bf16 %v197, %v196
    %v199 = vld [vmem:[#allocation6 + $0x40] sm:$0xf]
    %v200 = vld [vmem:[#allocation6 + $0x44] sm:$0xf]
    %v201 = vld [vmem:[#allocation6 + $0x48] sm:$0xf]
    %v202 = vld [vmem:[#allocation6 + $0x4c] sm:$0xf]
    %v203 = vld [vmem:[#allocation6 + $0x50] sm:$0xf]
    %v204 = vld [vmem:[#allocation6 + $0x54] sm:$0xf]
    %v205 = vld [vmem:[#allocation6 + $0x58] sm:$0xf]
    %v206 = vld [vmem:[#allocation6 + $0x5c] sm:$0xf]
    %v207 = vld [vmem:[#allocation6 + $0x60] sm:$0xf]
    %v208 = vld [vmem:[#allocation6 + $0x64] sm:$0xf]
    %v209 = vld [vmem:[#allocation6 + $0x68] sm:$0xf]
    %v210 = vld [vmem:[#allocation6 + $0x6c] sm:$0xf]
    %v211 = vld [vmem:[#allocation6 + $0x70] sm:$0xf]
    %v212 = vld [vmem:[#allocation6 + $0x74] sm:$0xf]
    %v213 = vld [vmem:[#allocation6 + $0x78] sm:$0xf]
    %v214 = vld [vmem:[#allocation6 + $0x7c] sm:$0xf]
    %v231 = vunpack.c.l.b16 %v199
    %v232 = vunpack.c.l.b16 %v200
    %v233 = vunpack.c.l.b16 %v201
    %v234 = vunpack.c.l.b16 %v202
    %v235 = vunpack.c.l.b16 %v203
    %v236 = vunpack.c.l.b16 %v204
    %v237 = vunpack.c.l.b16 %v205
    %v238 = vunpack.c.l.b16 %v206
    %v239 = vunpack.c.l.b16 %v207
    %v240 = vunpack.c.l.b16 %v208
    %v241 = vunpack.c.l.b16 %v209
    %v242 = vunpack.c.l.b16 %v210
    %v243 = vunpack.c.l.b16 %v211
    %v244 = vunpack.c.l.b16 %v212
    %v245 = vunpack.c.l.b16 %v213
    %v246 = vunpack.c.l.b16 %v214
    %v247 = vpack.c.b16 %v232, %v231
    %v248 = vpack.c.b16 %v234, %v233
    %v249 = vpack.c.b16 %v236, %v235
    %v250 = vpack.c.b16 %v238, %v237
    %v251 = vpack.c.b16 %v240, %v239
    %v252 = vpack.c.b16 %v242, %v241
    %v253 = vpack.c.b16 %v244, %v243
    %v254 = vpack.c.b16 %v246, %v245
    %263 = vmatpush.bf16.msra.mxu0 %v254
    %264 = vmatpush.bf16.msra.mxu0 %v253
    %265 = vmatpush.bf16.msra.mxu0 %v252
    %266 = vmatpush.bf16.msra.mxu0 %v251
    %267 = vmatpush.bf16.msra.mxu0 %v250
    %268 = vmatpush.bf16.msra.mxu0 %v249
    %269 = vmatpush.bf16.msra.mxu0 %v248
    %270 = vmatpush.bf16.msra.mxu0 %v247
    %271 = vmatmul.bf16.gmra.mxu0 %v198
    %v272 = vpop.f32.mrf.mxu0
    %v273 = vadd.f32 0.0, %v272
    %v274 = vpop.f32.mrf.mxu0
    %v275 = vadd.f32 0.0, %v274
    %276 = vdwg.mxu0
    %v277 = vadd.f32 %v185, %v273
    %v278 = vadd.f32 %v186, %v275
    %s279 = smul.f32 %s194, 2.0
    %v280 = vstv %s279
    %v281 = vmul.f32 %v280, %v82
    %v282 = vmul.f32 %v280, %v97
    %v283 = vmul.f32 %v281, %v196
    %v284 = vmul.f32 %v282, %v197
    %s285 = sadd.f32 %s57, 4.0
    %v286 = vstv %s285
    %v287 = vmul.f32 %v286, %v100
    %v288 = vmul.f32 %v286, %v101
    %v289 = vsub.f32 %v283, %v287
    %v290 = vsub.f32 %v284, %v288
    %v291 = vpack.c.bf16 %v290, %v289
    %v292 = vld [vmem:[#allocation6 + $0x80] sm:$0xf]
    %v293 = vld [vmem:[#allocation6 + $0x84] sm:$0xf]
    %v294 = vld [vmem:[#allocation6 + $0x88] sm:$0xf]
    %v295 = vld [vmem:[#allocation6 + $0x8c] sm:$0xf]
    %v296 = vld [vmem:[#allocation6 + $0x90] sm:$0xf]
    %v297 = vld [vmem:[#allocation6 + $0x94] sm:$0xf]
    %v298 = vld [vmem:[#allocation6 + $0x98] sm:$0xf]
    %v299 = vld [vmem:[#allocation6 + $0x9c] sm:$0xf]
    %v300 = vld [vmem:[#allocation6 + $0xa0] sm:$0xf]
    %v301 = vld [vmem:[#allocation6 + $0xa4] sm:$0xf]
    %v302 = vld [vmem:[#allocation6 + $0xa8] sm:$0xf]
    %v303 = vld [vmem:[#allocation6 + $0xac] sm:$0xf]
    %v304 = vld [vmem:[#allocation6 + $0xb0] sm:$0xf]
    %v305 = vld [vmem:[#allocation6 + $0xb4] sm:$0xf]
    %v306 = vld [vmem:[#allocation6 + $0xb8] sm:$0xf]
    %v307 = vld [vmem:[#allocation6 + $0xbc] sm:$0xf]
    %v324 = vunpack.c.l.b16 %v292
    %v325 = vunpack.c.l.b16 %v293
    %v326 = vunpack.c.l.b16 %v294
    %v327 = vunpack.c.l.b16 %v295
    %v328 = vunpack.c.l.b16 %v296
    %v329 = vunpack.c.l.b16 %v297
    %v330 = vunpack.c.l.b16 %v298
    %v331 = vunpack.c.l.b16 %v299
    %v332 = vunpack.c.l.b16 %v300
    %v333 = vunpack.c.l.b16 %v301
    %v334 = vunpack.c.l.b16 %v302
    %v335 = vunpack.c.l.b16 %v303
    %v336 = vunpack.c.l.b16 %v304
    %v337 = vunpack.c.l.b16 %v305
    %v338 = vunpack.c.l.b16 %v306
    %v339 = vunpack.c.l.b16 %v307
    %v340 = vpack.c.b16 %v325, %v324
    %v341 = vpack.c.b16 %v327, %v326
    %v342 = vpack.c.b16 %v329, %v328
    %v343 = vpack.c.b16 %v331, %v330
    %v344 = vpack.c.b16 %v333, %v332
    %v345 = vpack.c.b16 %v335, %v334
    %v346 = vpack.c.b16 %v337, %v336
    %v347 = vpack.c.b16 %v339, %v338
    %356 = vmatpush.bf16.msra.mxu0 %v347
    %357 = vmatpush.bf16.msra.mxu0 %v346
    %358 = vmatpush.bf16.msra.mxu0 %v345
    %359 = vmatpush.bf16.msra.mxu0 %v344
    %360 = vmatpush.bf16.msra.mxu0 %v343
    %361 = vmatpush.bf16.msra.mxu0 %v342
    %362 = vmatpush.bf16.msra.mxu0 %v341
    %363 = vmatpush.bf16.msra.mxu0 %v340
    %364 = vmatmul.bf16.gmra.mxu0 %v291
    %v365 = vpop.f32.mrf.mxu0
    %v366 = vadd.f32 0.0, %v365
    %v367 = vpop.f32.mrf.mxu0
    %v368 = vadd.f32 0.0, %v367
    %369 = vdwg.mxu0
    %v370 = vadd.f32 %v277, %v366
    %v371 = vadd.f32 %v278, %v368
    %v372 = vlaneseq
    %v373 = vand.u32 %v372, 127
    %vm374 = vcmp.lt.s32.totalorder %v373, 32
    %v375 = vsel %vm374, %v370, 0.0
    %v376 = vsel %vm374, %v371, 0.0
    %377 = vadd.xlane.f32.xlu0 %v375
    %v378 = vpop.xlane.xlu0 %377
    %379 = vadd.xlane.f32.xlu0 %v376
    %v380 = vpop.xlane.xlu0 %379
    %v381 = vmul.f32 %v378, 0.03125
    %v382 = vmul.f32 %v380, 0.03125
    %v383 = vsub.f32 %v370, %v381
    %v384 = vsub.f32 %v371, %v382
    %v385 = vsel %vm374, %v383, 0.0
    %v386 = vsel %vm374, %v384, 0.0
    %v387 = vmul.f32 %v385, %v385
    %v388 = vmul.f32 %v386, %v386
    %389 = vadd.xlane.f32.xlu0 %v387
    %v390 = vpop.xlane.xlu0 %389
    %391 = vadd.xlane.f32.xlu0 %v388
    %v392 = vpop.xlane.xlu0 %391
    %v393 = vmul.f32 %v390, 0.03125
    %v394 = vmul.f32 %v392, 0.03125
    %v395 = vadd.f32 %v393, 1e-05
    %v396 = vadd.f32 %v394, 1e-05
    %v397 = vrsqrt.pop %v395
    %v398 = vmul.f32 %v397, %v395
    %v399 = vmul.f32 %v398, %v397
    %v400 = vmul.f32 0.5, %v399
    %v401 = vsub.f32 1.5, %v400
    %v402 = vmul.f32 %v397, %v401
    %vm403 = vweird.f32 %v395
    %vm404 = vweird.f32 %v397
    %vm405 = vmor %vm403, %vm404
    %v406 = vsel %vm405, %v397, %v402
    %v407 = vrsqrt.pop %v396
    %v408 = vmul.f32 %v407, %v396
    %v409 = vmul.f32 %v408, %v407
    %v410 = vmul.f32 0.5, %v409
    %v411 = vsub.f32 1.5, %v410
    %v412 = vmul.f32 %v407, %v411
    %vm413 = vweird.f32 %v396
    %vm414 = vweird.f32 %v407
    %vm415 = vmor %vm413, %vm414
    %v416 = vsel %vm415, %v407, %v412
    %v417 = vmul.f32 %v385, %v406
    %v418 = vmul.f32 %v386, %v416
    %v419 = vld [vmem:[%s4] sm:$0x1]
    %v421 = vperm.slane %v419, 0
    %v423 = vmul.f32 %v417, %v421
    %v424 = vmul.f32 %v418, %v421
    %v425 = vld [vmem:[%s5] sm:$0x1]
    %v427 = vperm.slane %v425, 0
    %v429 = vadd.f32 %v423, %v427
    %v430 = vadd.f32 %v424, %v427
    %431 = vst [vmem:[#allocation8] sm:$0xff] %v429
    %432 = vst [vmem:[#allocation8 + $0x8] sm:$0xff] %v430
    // Predicated region
    $region34: #{tpu_custom_call.1} parent=1 // pred_check
      _
    $region35: #{tpu_custom_call.1} parent=1 // pred_check_branch
      %434 = sbr.rel (0) target = $region37
    $region36: #{tpu_custom_call.1} parent=1 // pred_region
      %436 = vsyncadd [#allocation5], 0
      %s437 = sshll.u32 [#allocation8], 4
      %s438 = int_to_ptr.vmem [resolvable:$true] %s437
      %s439 = sshll.u32 %s6, 4
      %s440 = int_to_ptr.hbm [resolvable:$true] %s439
      %445 = dma.vmem_to_hbm [thread:$0]  %s438, 256, %s440, [#allocation5], 128, 128, 8
    $region37: #{tpu_custom_call.1} parent=1 // pred_fallthru
      _
    // Predicated region
    $region38: #{tpu_custom_call.1} parent=1 // pred_check
      _
    $region39: #{tpu_custom_call.1} parent=1 // pred_check_branch
      %447 = sbr.rel (0) target = $region41
    $region40: #{tpu_custom_call.1} parent=1 // pred_region
      %449 = dma.done [#allocation5], 256
    $region41: #{tpu_custom_call.1} parent=1 // pred_fallthru
      _
    %450 = vsyncpa [#allocation4], 1
    %451 = vsyncpa [#allocation7], 1
    %452 = vsyncpa [#allocation5], 1

// kernel: tpu_custom_call.1
$region0: #{tpu_custom_call.1}
  #allocation0 [shape = 'u32[]', space=smem, size = 0x4, offset = 0x4, fixed_abs, tag = 'smem constant byte address 0x4 - core index']
  #allocation1 [shape = 'u32[72,128]{1,0:T(1,128)}', space=vmem, size = 0x9000, scoped, tag = 'internal scratch']
  #allocation2 [shape = 'f32[1]{0:T(128)S(6)}', space=smem, size = 0x200, scoped, tag = 'scoped memory for tpu_custom_call.1']
  %s0 = inlined_call_operand.<no memory space> [shape: f32[1], index: 0, kind: input, shape index: {}]
  %s1 = inlined_call_operand.hbm [shape: f32[16,128], index: 1, kind: input, shape index: {}]
  %s2 = inlined_call_operand.vmem [shape: f32[1,128], index: 2, kind: input, shape index: {}]
  %s3 = inlined_call_operand.hbm [shape: bf16[384,128], index: 3, kind: input, shape index: {}]
  %s4 = inlined_call_operand.vmem [shape: f32[1,128], index: 4, kind: input, shape index: {}]
  %s5 = inlined_call_operand.vmem [shape: f32[1,128], index: 5, kind: input, shape index: {}]
  %s6 = inlined_call_operand.hbm [shape: f32[16,128], index: 6, kind: output, shape index: {}]
  %s7 = sld [smem:[#allocation0]]
  $region42: #{tpu_custom_call.1} parent=0
    _
  %s9 = ssub.s32 1, %s7
  %s10 = scalar_select 0, %s9, %s7
  %11 = sst [smem:[#allocation2]] %s0
  $region1: #{tpu_custom_call.1} parent=0
    #allocation3 [shape = 'u8[8192]{0}', space=vmem, size = 0x2000, scoped, tag = 'input window, operand 1, single buffered']
    #allocation4 [shape = 's32[1]{0}', space=sflag, size = 0x4, scoped, tag = 'scoped memory for tpu_custom_call.1']
    #allocation5 [shape = 's32[1]{0}', space=sflag, size = 0x4, scoped, tag = 'scoped memory for tpu_custom_call.1']
    #allocation6 [shape = 'u8[98304]{0}', space=vmem, size = 0x18000, scoped, tag = 'input window, operand 3, single buffered']
    #allocation7 [shape = 's32[1]{0}', space=sflag, size = 0x4, scoped, tag = 'scoped memory for tpu_custom_call.1']
    #allocation8 [shape = 'u8[8192]{0}', space=vmem, size = 0x2000, scoped, tag = 'output window, operand 0, single buffered']
    %12 = vsyncpa [#allocation4], 0
    %13 = vsyncpa [#allocation7], 0
    %14 = vsyncpa [#allocation5], 0
    // Predicated region
    $region2: #{tpu_custom_call.1} parent=1 // pred_check
      _
    $region3: #{tpu_custom_call.1} parent=1 // pred_check_branch
      %16 = sbr.rel (0) target = $region5
    $region4: #{tpu_custom_call.1} parent=1 // pred_region
      _
    $region5: #{tpu_custom_call.1} parent=1 // pred_fallthru
      _
    // Predicated region
    $region6: #{tpu_custom_call.1} parent=1 // pred_check
      _
    $region7: #{tpu_custom_call.1} parent=1 // pred_check_branch
      %18 = sbr.rel (0) target = $region9
    $region8: #{tpu_custom_call.1} parent=1 // pred_region
      %20 = vsyncadd [#allocation4], 0
      %s21 = sshll.u32 %s1, 4
      %s22 = int_to_ptr.hbm [resolvable:$true] %s21
      %s23 = sshll.u32 [#allocation3], 4
      %s24 = int_to_ptr.vmem [resolvable:$true] %s23
      %29 = dma.hbm_to_vmem [thread:$0]  %s22, 256, %s24, [#allocation4], 128, 128, 8
    $region9: #{tpu_custom_call.1} parent=1 // pred_fallthru
      _
    // Predicated region
    $region10: #{tpu_custom_call.1} parent=1 // pred_check
      _
    $region11: #{tpu_custom_call.1} parent=1 // pred_check_branch
      %31 = sbr.rel (0) target = $region13
    $region12: #{tpu_custom_call.1} parent=1 // pred_region
      _
    $region13: #{tpu_custom_call.1} parent=1 // pred_fallthru
      _
    // Predicated region
    $region14: #{tpu_custom_call.1} parent=1 // pred_check
      _
    $region15: #{tpu_custom_call.1} parent=1 // pred_check_branch
      %33 = sbr.rel (0) target = $region17
    $region16: #{tpu_custom_call.1} parent=1 // pred_region
      %35 = vsyncadd [#allocation7], 0
      %s36 = sshll.u32 %s3, 4
      %s37 = int_to_ptr.hbm [resolvable:$true] %s36
      %s38 = sshll.u32 [#allocation6], 4
      %s39 = int_to_ptr.vmem [resolvable:$true] %s38
      %44 = dma.hbm_to_vmem [thread:$0]  %s37, 3072, %s39, [#allocation7], 64, 64, 4
    $region17: #{tpu_custom_call.1} parent=1 // pred_fallthru
      _
    // Predicated region
    $region18: #{tpu_custom_call.1} parent=1 // pred_check
      _
    $region19: #{tpu_custom_call.1} parent=1 // pred_check_branch
      %46 = sbr.rel (0) target = $region21
    $region20: #{tpu_custom_call.1} parent=1 // pred_region
      _
    $region21: #{tpu_custom_call.1} parent=1 // pred_fallthru
      _
    // Predicated region
    $region22: #{tpu_custom_call.1} parent=1 // pred_check
      _
    $region23: #{tpu_custom_call.1} parent=1 // pred_check_branch
      %48 = sbr.rel (0) target = $region25
    $region24: #{tpu_custom_call.1} parent=1 // pred_region
      _
    $region25: #{tpu_custom_call.1} parent=1 // pred_fallthru
      _
    // Predicated region
    $region26: #{tpu_custom_call.1} parent=1 // pred_check
      _
    $region27: #{tpu_custom_call.1} parent=1 // pred_check_branch
      %50 = sbr.rel (0) target = $region29
    $region28: #{tpu_custom_call.1} parent=1 // pred_region
      %52 = dma.done [#allocation4], 256
    $region29: #{tpu_custom_call.1} parent=1 // pred_fallthru
      _
    // Predicated region
    $region30: #{tpu_custom_call.1} parent=1 // pred_check
      _
    $region31: #{tpu_custom_call.1} parent=1 // pred_check_branch
      %54 = sbr.rel (0) target = $region33
    $region32: #{tpu_custom_call.1} parent=1 // pred_region
      %56 = dma.done [#allocation7], 3072
    $region33: #{tpu_custom_call.1} parent=1 // pred_fallthru
      _
    %s57 = sld [smem:[#allocation2]]
    %v58 = vld [vmem:[#allocation3] sm:$0xff]
    %v59 = vld [vmem:[#allocation3 + $0x8] sm:$0xff]
    %v60 = vxor.u32 %v58, 2147483648
    %v61 = vxor.u32 %v59, 2147483648
    %v62 = vmul.f32 %v60, 1.442695
    %v63 = vpow.pop %v62
    %v64 = vmul.f32 %v61, 1.442695
    %v65 = vpow.pop %v64
    %v66 = vadd.f32 %v63, 1.0
    %v67 = vadd.f32 %v65, 1.0
    %v68 = vrcp.pop %v66
    %v69 = vmul.f32 %v66, %v68
    %v70 = vsub.f32 1.0, %v69
    %v71 = vmul.f32 %v68, %v70
    %v72 = vadd.f32 %v68, %v71
    %vm73 = vweird.f32 %v66
    %vm74 = vweird.f32 %v68
    %vm75 = vmor %vm73, %vm74
    %v76 = vsel %vm75, %v68, %v72
    %v77 = vand.u32 2147483647, %v66
    %vm78 = vcmp.eq.f32.partialorder %v77, 8.507059e+37
    %v79 = vand.u32 %v66, 2147483648
    %v80 = vor.u32 1.1754944e-38, %v79
    %v81 = vsel %vm78, %v80, %v76
    %v82 = vmul.f32 1.0, %v81
    %v83 = vrcp.pop %v67
    %v84 = vmul.f32 %v67, %v83
    %v85 = vsub.f32 1.0, %v84
    %v86 = vmul.f32 %v83, %v85
    %v87 = vadd.f32 %v83, %v86
    %vm88 = vweird.f32 %v67
    %vm89 = vweird.f32 %v83
    %vm90 = vmor %vm88, %vm89
    %v91 = vsel %vm90, %v83, %v87
    %v92 = vand.u32 2147483647, %v67
    %vm93 = vcmp.eq.f32.partialorder %v92, 8.507059e+37
    %v94 = vand.u32 %v67, 2147483648
    %v95 = vor.u32 1.1754944e-38, %v94
    %v96 = vsel %vm93, %v95, %v91
    %v97 = vmul.f32 1.0, %v96
    %s98 = smul.f32 %s57, 2.0
    %v99 = vstv %s98
    %v100 = vmul.f32 %v99, %v82
    %v101 = vmul.f32 %v99, %v97
    %v102 = vld [vmem:[%s2] sm:$0x1]
    %v103 = vpack.c.bf16 %v101, %v100
    %v104 = vld [vmem:[#allocation6] sm:$0xf]
    %v105 = vld [vmem:[#allocation6 + $0x4] sm:$0xf]
    %v106 = vld [vmem:[#allocation6 + $0x8] sm:$0xf]
    %v107 = vld [vmem:[#allocation6 + $0xc] sm:$0xf]
    %v108 = vld [vmem:[#allocation6 + $0x10] sm:$0xf]
    %v109 = vld [vmem:[#allocation6 + $0x14] sm:$0xf]
    %v110 = vld [vmem:[#allocation6 + $0x18] sm:$0xf]
    %v111 = vld [vmem:[#allocation6 + $0x1c] sm:$0xf]
    %v112 = vld [vmem:[#allocation6 + $0x20] sm:$0xf]
    %v113 = vld [vmem:[#allocation6 + $0x24] sm:$0xf]
    %v114 = vld [vmem:[#allocation6 + $0x28] sm:$0xf]
    %v115 = vld [vmem:[#allocation6 + $0x2c] sm:$0xf]
    %v116 = vld [vmem:[#allocation6 + $0x30] sm:$0xf]
    %v117 = vld [vmem:[#allocation6 + $0x34] sm:$0xf]
    %v118 = vld [vmem:[#allocation6 + $0x38] sm:$0xf]
    %v119 = vld [vmem:[#allocation6 + $0x3c] sm:$0xf]
    %v136 = vunpack.c.l.b16 %v104
    %v137 = vunpack.c.l.b16 %v105
    %v138 = vunpack.c.l.b16 %v106
    %v139 = vunpack.c.l.b16 %v107
    %v140 = vunpack.c.l.b16 %v108
    %v141 = vunpack.c.l.b16 %v109
    %v142 = vunpack.c.l.b16 %v110
    %v143 = vunpack.c.l.b16 %v111
    %v144 = vunpack.c.l.b16 %v112
    %v145 = vunpack.c.l.b16 %v113
    %v146 = vunpack.c.l.b16 %v114
    %v147 = vunpack.c.l.b16 %v115
    %v148 = vunpack.c.l.b16 %v116
    %v149 = vunpack.c.l.b16 %v117
    %v150 = vunpack.c.l.b16 %v118
    %v151 = vunpack.c.l.b16 %v119
    %v152 = vpack.c.b16 %v137, %v136
    %v153 = vpack.c.b16 %v139, %v138
    %v154 = vpack.c.b16 %v141, %v140
    %v155 = vpack.c.b16 %v143, %v142
    %v156 = vpack.c.b16 %v145, %v144
    %v157 = vpack.c.b16 %v147, %v146
    %v158 = vpack.c.b16 %v149, %v148
    %v159 = vpack.c.b16 %v151, %v150
    %168 = vmatpush.bf16.msra.mxu0 %v159
    %169 = vmatpush.bf16.msra.mxu0 %v158
    %170 = vmatpush.bf16.msra.mxu0 %v157
    %171 = vmatpush.bf16.msra.mxu0 %v156
    %172 = vmatpush.bf16.msra.mxu0 %v155
    %173 = vmatpush.bf16.msra.mxu0 %v154
    %174 = vmatpush.bf16.msra.mxu0 %v153
    %175 = vmatpush.bf16.msra.mxu0 %v152
    %176 = vmatmul.bf16.gmra.mxu0 %v103
    %v177 = vpop.f32.mrf.mxu0
    %v178 = vadd.f32 0.0, %v177
    %v179 = vpop.f32.mrf.mxu0
    %v180 = vadd.f32 0.0, %v179
    %181 = vdwg.mxu0
    %v183 = vperm.slane %v102, 0
    %v185 = vadd.f32 %v183, %v178
    %v186 = vadd.f32 %v183, %v180
    %s187 = sadd.f32 %s57, 1.0
    %s188 = smul.f32 %s187, 2.0
    %v189 = vstv %s188
    %v190 = vmul.f32 %v189, %v82
    %v191 = vmul.f32 %v189, %v97
    %v192 = vmul.f32 %v190, %v100
    %v193 = vmul.f32 %v191, %v101
    %s194 = sadd.f32 %s57, 2.0
    %v195 = vstv %s194
    %v196 = vsub.f32 %v192, %v195
    %v197 = vsub.f32 %v193, %v195
    %v198 = vpack.c.bf16 %v197, %v196
    %v199 = vld [vmem:[#allocation6 + $0x40] sm:$0xf]
    %v200 = vld [vmem:[#allocation6 + $0x44] sm:$0xf]
    %v201 = vld [vmem:[#allocation6 + $0x48] sm:$0xf]
    %v202 = vld [vmem:[#allocation6 + $0x4c] sm:$0xf]
    %v203 = vld [vmem:[#allocation6 + $0x50] sm:$0xf]
    %v204 = vld [vmem:[#allocation6 + $0x54] sm:$0xf]
    %v205 = vld [vmem:[#allocation6 + $0x58] sm:$0xf]
    %v206 = vld [vmem:[#allocation6 + $0x5c] sm:$0xf]
    %v207 = vld [vmem:[#allocation6 + $0x60] sm:$0xf]
    %v208 = vld [vmem:[#allocation6 + $0x64] sm:$0xf]
    %v209 = vld [vmem:[#allocation6 + $0x68] sm:$0xf]
    %v210 = vld [vmem:[#allocation6 + $0x6c] sm:$0xf]
    %v211 = vld [vmem:[#allocation6 + $0x70] sm:$0xf]
    %v212 = vld [vmem:[#allocation6 + $0x74] sm:$0xf]
    %v213 = vld [vmem:[#allocation6 + $0x78] sm:$0xf]
    %v214 = vld [vmem:[#allocation6 + $0x7c] sm:$0xf]
    %v231 = vunpack.c.l.b16 %v199
    %v232 = vunpack.c.l.b16 %v200
    %v233 = vunpack.c.l.b16 %v201
    %v234 = vunpack.c.l.b16 %v202
    %v235 = vunpack.c.l.b16 %v203
    %v236 = vunpack.c.l.b16 %v204
    %v237 = vunpack.c.l.b16 %v205
    %v238 = vunpack.c.l.b16 %v206
    %v239 = vunpack.c.l.b16 %v207
    %v240 = vunpack.c.l.b16 %v208
    %v241 = vunpack.c.l.b16 %v209
    %v242 = vunpack.c.l.b16 %v210
    %v243 = vunpack.c.l.b16 %v211
    %v244 = vunpack.c.l.b16 %v212
    %v245 = vunpack.c.l.b16 %v213
    %v246 = vunpack.c.l.b16 %v214
    %v247 = vpack.c.b16 %v232, %v231
    %v248 = vpack.c.b16 %v234, %v233
    %v249 = vpack.c.b16 %v236, %v235
    %v250 = vpack.c.b16 %v238, %v237
    %v251 = vpack.c.b16 %v240, %v239
    %v252 = vpack.c.b16 %v242, %v241
    %v253 = vpack.c.b16 %v244, %v243
    %v254 = vpack.c.b16 %v246, %v245
    %263 = vmatpush.bf16.msra.mxu0 %v254
    %264 = vmatpush.bf16.msra.mxu0 %v253
    %265 = vmatpush.bf16.msra.mxu0 %v252
    %266 = vmatpush.bf16.msra.mxu0 %v251
    %267 = vmatpush.bf16.msra.mxu0 %v250
    %268 = vmatpush.bf16.msra.mxu0 %v249
    %269 = vmatpush.bf16.msra.mxu0 %v248
    %270 = vmatpush.bf16.msra.mxu0 %v247
    %271 = vmatmul.bf16.gmra.mxu0 %v198
    %v272 = vpop.f32.mrf.mxu0
    %v273 = vadd.f32 0.0, %v272
    %v274 = vpop.f32.mrf.mxu0
    %v275 = vadd.f32 0.0, %v274
    %276 = vdwg.mxu0
    %v277 = vadd.f32 %v185, %v273
    %v278 = vadd.f32 %v186, %v275
    %s279 = smul.f32 %s194, 2.0
    %v280 = vstv %s279
    %v281 = vmul.f32 %v280, %v82
    %v282 = vmul.f32 %v280, %v97
    %v283 = vmul.f32 %v281, %v196
    %v284 = vmul.f32 %v282, %v197
    %s285 = sadd.f32 %s57, 4.0
    %v286 = vstv %s285
    %v287 = vmul.f32 %v286, %v100
    %v288 = vmul.f32 %v286, %v101
    %v289 = vsub.f32 %v283, %v287
    %v290 = vsub.f32 %v284, %v288
    %v291 = vpack.c.bf16 %v290, %v289
    %v292 = vld [vmem:[#allocation6 + $0x80] sm:$0xf]
    %v293 = vld [vmem:[#allocation6 + $0x84] sm:$0xf]
    %v294 = vld [vmem:[#allocation6 + $0x88] sm:$0xf]
    %v295 = vld [vmem:[#allocation6 + $0x8c] sm:$0xf]
    %v296 = vld [vmem:[#allocation6 + $0x90] sm:$0xf]
    %v297 = vld [vmem:[#allocation6 + $0x94] sm:$0xf]
    %v298 = vld [vmem:[#allocation6 + $0x98] sm:$0xf]
    %v299 = vld [vmem:[#allocation6 + $0x9c] sm:$0xf]
    %v300 = vld [vmem:[#allocation6 + $0xa0] sm:$0xf]
    %v301 = vld [vmem:[#allocation6 + $0xa4] sm:$0xf]
    %v302 = vld [vmem:[#allocation6 + $0xa8] sm:$0xf]
    %v303 = vld [vmem:[#allocation6 + $0xac] sm:$0xf]
    %v304 = vld [vmem:[#allocation6 + $0xb0] sm:$0xf]
    %v305 = vld [vmem:[#allocation6 + $0xb4] sm:$0xf]
    %v306 = vld [vmem:[#allocation6 + $0xb8] sm:$0xf]
    %v307 = vld [vmem:[#allocation6 + $0xbc] sm:$0xf]
    %v324 = vunpack.c.l.b16 %v292
    %v325 = vunpack.c.l.b16 %v293
    %v326 = vunpack.c.l.b16 %v294
    %v327 = vunpack.c.l.b16 %v295
    %v328 = vunpack.c.l.b16 %v296
    %v329 = vunpack.c.l.b16 %v297
    %v330 = vunpack.c.l.b16 %v298
    %v331 = vunpack.c.l.b16 %v299
    %v332 = vunpack.c.l.b16 %v300
    %v333 = vunpack.c.l.b16 %v301
    %v334 = vunpack.c.l.b16 %v302
    %v335 = vunpack.c.l.b16 %v303
    %v336 = vunpack.c.l.b16 %v304
    %v337 = vunpack.c.l.b16 %v305
    %v338 = vunpack.c.l.b16 %v306
    %v339 = vunpack.c.l.b16 %v307
    %v340 = vpack.c.b16 %v325, %v324
    %v341 = vpack.c.b16 %v327, %v326
    %v342 = vpack.c.b16 %v329, %v328
    %v343 = vpack.c.b16 %v331, %v330
    %v344 = vpack.c.b16 %v333, %v332
    %v345 = vpack.c.b16 %v335, %v334
    %v346 = vpack.c.b16 %v337, %v336
    %v347 = vpack.c.b16 %v339, %v338
    %356 = vmatpush.bf16.msra.mxu0 %v347
    %357 = vmatpush.bf16.msra.mxu0 %v346
    %358 = vmatpush.bf16.msra.mxu0 %v345
    %359 = vmatpush.bf16.msra.mxu0 %v344
    %360 = vmatpush.bf16.msra.mxu0 %v343
    %361 = vmatpush.bf16.msra.mxu0 %v342
    %362 = vmatpush.bf16.msra.mxu0 %v341
    %363 = vmatpush.bf16.msra.mxu0 %v340
    %364 = vmatmul.bf16.gmra.mxu0 %v291
    %v365 = vpop.f32.mrf.mxu0
    %v366 = vadd.f32 0.0, %v365
    %v367 = vpop.f32.mrf.mxu0
    %v368 = vadd.f32 0.0, %v367
    %369 = vdwg.mxu0
    %v370 = vadd.f32 %v277, %v366
    %v371 = vadd.f32 %v278, %v368
    %v372 = vlaneseq
    %v373 = vand.u32 %v372, 127
    %vm374 = vcmp.lt.s32.totalorder %v373, 32
    %v375 = vsel %vm374, %v370, 0.0
    %v376 = vsel %vm374, %v371, 0.0
    %377 = vadd.xlane.f32.xlu0 %v375
    %v378 = vpop.xlane.xlu0 %377
    %379 = vadd.xlane.f32.xlu0 %v376
    %v380 = vpop.xlane.xlu0 %379
    %v381 = vmul.f32 %v378, 0.03125
    %v382 = vmul.f32 %v380, 0.03125
    %v383 = vsub.f32 %v370, %v381
    %v384 = vsub.f32 %v371, %v382
    %v385 = vsel %vm374, %v383, 0.0
    %v386 = vsel %vm374, %v384, 0.0
    %v387 = vmul.f32 %v385, %v385
    %v388 = vmul.f32 %v386, %v386
    %389 = vadd.xlane.f32.xlu0 %v387
    %v390 = vpop.xlane.xlu0 %389
    %391 = vadd.xlane.f32.xlu0 %v388
    %v392 = vpop.xlane.xlu0 %391
    %v393 = vmul.f32 %v390, 0.03125
    %v394 = vmul.f32 %v392, 0.03125
    %v395 = vadd.f32 %v393, 1e-05
    %v396 = vadd.f32 %v394, 1e-05
    %v397 = vrsqrt.pop %v395
    %v398 = vmul.f32 %v397, %v395
    %v399 = vmul.f32 %v398, %v397
    %v400 = vmul.f32 0.5, %v399
    %v401 = vsub.f32 1.5, %v400
    %v402 = vmul.f32 %v397, %v401
    %vm403 = vweird.f32 %v395
    %vm404 = vweird.f32 %v397
    %vm405 = vmor %vm403, %vm404
    %v406 = vsel %vm405, %v397, %v402
    %v407 = vrsqrt.pop %v396
    %v408 = vmul.f32 %v407, %v396
    %v409 = vmul.f32 %v408, %v407
    %v410 = vmul.f32 0.5, %v409
    %v411 = vsub.f32 1.5, %v410
    %v412 = vmul.f32 %v407, %v411
    %vm413 = vweird.f32 %v396
    %vm414 = vweird.f32 %v407
    %vm415 = vmor %vm413, %vm414
    %v416 = vsel %vm415, %v407, %v412
    %v417 = vmul.f32 %v385, %v406
    %v418 = vmul.f32 %v386, %v416
    %v419 = vld [vmem:[%s4] sm:$0x1]
    %v421 = vperm.slane %v419, 0
    %v423 = vmul.f32 %v417, %v421
    %v424 = vmul.f32 %v418, %v421
    %v425 = vld [vmem:[%s5] sm:$0x1]
    %v427 = vperm.slane %v425, 0
    %v429 = vadd.f32 %v423, %v427
    %v430 = vadd.f32 %v424, %v427
    %431 = vst [vmem:[#allocation8] sm:$0xff] %v429
    %432 = vst [vmem:[#allocation8 + $0x8] sm:$0xff] %v430
    // Predicated region
    $region34: #{tpu_custom_call.1} parent=1 // pred_check
      _
    $region35: #{tpu_custom_call.1} parent=1 // pred_check_branch
      %434 = sbr.rel (0) target = $region37
    $region36: #{tpu_custom_call.1} parent=1 // pred_region
      %436 = vsyncadd [#allocation5], 0
      %s437 = sshll.u32 [#allocation8], 4
      %s438 = int_to_ptr.vmem [resolvable:$true] %s437
      %s439 = sshll.u32 %s6, 4
      %s440 = int_to_ptr.hbm [resolvable:$true] %s439
      %445 = dma.vmem_to_hbm [thread:$0]  %s438, 256, %s440, [#allocation5], 128, 128, 8
    $region37: #{tpu_custom_call.1} parent=1 // pred_fallthru
      _
    // Predicated region
    $region38: #{tpu_custom_call.1} parent=1 // pred_check
      _
    $region39: #{tpu_custom_call.1} parent=1 // pred_check_branch
      %447 = sbr.rel (0) target = $region41
    $region40: #{tpu_custom_call.1} parent=1 // pred_region
      %449 = dma.done [#allocation5], 256
    $region41: #{tpu_custom_call.1} parent=1 // pred_fallthru
      _
    %450 = vsyncpa [#allocation4], 1
    %451 = vsyncpa [#allocation7], 1
    %452 = vsyncpa [#allocation5], 1

</llo_original>
